<compile_context>
chip_gen: v5e
topology: v5e:2x2
jax: 0.10.0
libtpu: 0.0.40
codegen_flags: <defaults>
</compile_context>

<pallas_src>
import functools

import jax
import jax.numpy as jnp
from jax.experimental import pallas as pl
from jax.experimental.pallas import tpu as pltpu


def _round_up(n, m):
    return ((n + m - 1) // m) * m


def _choose_tile_b(batch, max_tile):
    """Pick a batch tile: as large as possible while minimizing padded rows."""
    b8 = _round_up(batch, 8)
    if b8 <= max_tile:
        return b8                          # whole (8-aligned) batch in one tile
    best_tb = max_tile
    best_pad = _round_up(batch, max_tile) - batch
    cand = max_tile // 2
    while cand >= 128:
        pad = _round_up(batch, cand) - batch
        if pad < best_pad:
            best_tb, best_pad = cand, pad
        cand //= 2
    return best_tb


def _mlp_d_kernel(xa_ref, w1_ref, b1_ref, w2_ref, b2_ref, o_ref, *, neg_slope):
    # fc1 over the fused concat [x, att]: one MXU pass, f32 accumulation.
    h = jnp.dot(xa_ref[...], w1_ref[...], preferred_element_type=jnp.float32)
    h = h + b1_ref[...]                        # (tb, hid_p) f32
    h = jnp.where(h > 0, h, neg_slope * h)     # LeakyReLU, f32 epilogue

    # fc2 (out_dim == 1; no sigmoid in forward()): VPU multiply by the
    # broadcast w2 row + lane reduction; lane-narrow (tb, 1) store.
    out = jnp.sum(h * w2_ref[...], axis=-1, keepdims=True) + b2_ref[...]
    o_ref[...] = out.astype(o_ref.dtype)


def mlp_d_forward(x, att, w1, b1, w2, b2, *, neg_slope, tile_b=1024):
    """MLP_D forward.

    x:  (B, resSize) f32     att: (B, attSize) f32
    w1: (resSize+attSize, hid)  (PyTorch fc1.weight transposed), b1: (hid,)
    w2: (hid, 1)                (PyTorch fc2.weight transposed), b2: (1,)
    Returns (B, 1) f32 logits.
    """
    B, res = x.shape
    _, att_sz = att.shape
    K = res + att_sz
    hid = w1.shape[1]
    assert w1.shape[0] == K, "fc1 weight must cover resSize + attSize inputs"
    assert w2.shape == (hid, 1), "fc2 must be Linear(hid, 1)"

    hid_p = _round_up(hid, 128)
    f32, bf16 = jnp.float32, jnp.bfloat16

    # ---- batch tiling: big tiles, 8-aligned, minimal padding ----
    tb = _choose_tile_b(B, tile_b)
    pB = _round_up(B, tb)

    # Fused concat, unpadded feature axis, bf16 MXU operand (f32 accum in-kernel).
    xa = jnp.concatenate([x, att], axis=1).astype(bf16)
    if pB != B:
        xa = jnp.pad(xa, ((0, pB - B), (0, 0)))

    # Weights/biases: pad only the hid axis to 128 lanes (resident, DMA'd once).
    w1p = jnp.zeros((K, hid_p), bf16).at[:, :hid].set(w1.astype(bf16))
    b1p = jnp.zeros((1, hid_p), f32).at[0, :hid].set(b1.reshape(-1).astype(f32))
    w2r = jnp.zeros((1, hid_p), f32).at[0, :hid].set(w2.reshape(-1).astype(f32))
    b2p = b2.reshape(1, 1).astype(f32)

    kernel = functools.partial(_mlp_d_kernel, neg_slope=neg_slope)

    flops = 2 * pB * K * hid_p + 3 * pB * hid_p        # fc1 MXU + lrelu/fc2 VPU
    bytes_accessed = (
        xa.size * 2 + w1p.size * 2                     # bf16 activations/weights
        + (b1p.size + w2r.size + b2p.size) * 4         # f32 resident params
        + pB * 1 * 4                                   # f32 (B,1) writeback
    )

    out = pl.pallas_call(
        kernel,
        out_shape=jax.ShapeDtypeStruct((pB, 1), f32),
        grid_spec=pltpu.PrefetchScalarGridSpec(
            num_scalar_prefetch=0,
            grid=(pB // tb,),
            in_specs=[
                pl.BlockSpec((tb, K), lambda i: (i, 0)),        # [x|att] tile
                pl.BlockSpec((K, hid_p), lambda i: (0, 0)),     # w1 resident
                pl.BlockSpec((1, hid_p), lambda i: (0, 0)),     # b1 resident
                pl.BlockSpec((1, hid_p), lambda i: (0, 0)),     # w2 row resident
                pl.BlockSpec((1, 1), lambda i: (0, 0)),         # b2 resident
            ],
            out_specs=pl.BlockSpec((tb, 1), lambda i: (i, 0)),  # 4 B/row store
        ),
        compiler_params=pltpu.CompilerParams(
            dimension_semantics=("parallel",),
        ),
        cost_estimate=pl.CostEstimate(
            flops=flops, transcendentals=0, bytes_accessed=bytes_accessed),
    )(xa, w1p, b1p, w2r, b2p)

    # Slice off batch padding.
    return out[:B]


def init_params(key, res_size, att_size, hid):
    """weights_init: Linear.weight ~ N(0, 0.02), Linear.bias = 0."""
    k1, k2 = jax.random.split(key)
    std = 0.02
    # Stored as (in, out) == PyTorch weight (out, in) transposed.
    w1 = jax.random.normal(k1, (res_size + att_size, hid), jnp.float32) * std
    b1 = jnp.zeros((hid,), jnp.float32)
    w2 = jax.random.normal(k2, (hid, 1), jnp.float32) * std
    b2 = jnp.zeros((1,), jnp.float32)
    return dict(w1=w1, b1=b1, w2=w2, b2=b2)


if __name__ == "__main__":
    # opt = {'resSize': 32, 'attSize': 16, 'netD_hid': 64, 'activate_index': 0.2}
    RES_SIZE, ATT_SIZE, NETD_HID = 32, 16, 64
    ACTIVATE_INDEX = 0.2
    BATCH = 8

    key = jax.random.PRNGKey(0)
    kx, ka, kp = jax.random.split(key, 3)
    x = jax.random.normal(kx, (BATCH, RES_SIZE), jnp.float32)
    att = jax.random.normal(ka, (BATCH, ATT_SIZE), jnp.float32)
    params = init_params(kp, RES_SIZE, ATT_SIZE, NETD_HID)

    out = mlp_d_forward(
        x, att, params["w1"], params["b1"], params["w2"], params["b2"],
        neg_slope=ACTIVATE_INDEX,
    )
    out = jax.block_until_ready(out)
    assert out.shape == (BATCH, 1)

    # Reference 1: same operand rounding as the kernel (bf16 fc1 operands,
    # f32 accumulation / epilogue, f32 fc2).
    hb = jnp.concatenate([x, att], 1).astype(jnp.bfloat16)
    h = (jnp.dot(hb, params["w1"].astype(jnp.bfloat16),
                 preferred_element_type=jnp.float32)
         + params["b1"].reshape(1, -1))
    h = jnp.where(h > 0, h, ACTIVATE_INDEX * h)
    ref_bf16 = h @ params["w2"] + params["b2"].reshape(1, -1)
    assert jnp.allclose(out, ref_bf16, atol=1e-4, rtol=1e-4)

    # Reference 2: full-f32 PyTorch-equivalent math (loose tol for bf16 cast).
    hf = (jnp.concatenate([x, att], 1) @ params["w1"]
          + params["b1"].reshape(1, -1))
    hf = jnp.where(hf > 0, hf, ACTIVATE_INDEX * hf)
    ref_f32 = hf @ params["w2"] + params["b2"].reshape(1, -1)
    assert jnp.allclose(out, ref_f32, atol=2e-2, rtol=2e-2)

    print("KERNEL_OK")
</pallas_src>

<mosaic_0001>
module attributes {stable_mosaic.version = 11 : i64} {
  func.func @_mlp_d_kernel(%arg0: i32, %arg1: memref<8x48xbf16, #tpu.memory_space<vmem>>, %arg2: memref<48x128xbf16, #tpu.memory_space<vmem>>, %arg3: memref<1x128xf32, #tpu.memory_space<vmem>>, %arg4: memref<1x128xf32, #tpu.memory_space<vmem>>, %arg5: memref<1x1xf32, #tpu.memory_space<vmem>>, %arg6: memref<8x1xf32, #tpu.memory_space<vmem>>) attributes {dimension_semantics = [#tpu.dimension_semantics<parallel>], iteration_bounds = array<i64: 1>, scalar_prefetch = 0 : i64, scratch_operands = 0 : i64, tpu.core_type = #tpu.core_type<tc>, window_params = [{transform_indices = @transform_0, window_bounds = array<i64: 8, 48>}, {pipeline_mode = #tpu.pipeline_mode<synchronous>, transform_indices = @transform_1, window_bounds = array<i64: 48, 128>}, {pipeline_mode = #tpu.pipeline_mode<synchronous>, transform_indices = @transform_2, window_bounds = array<i64: 1, 128>}, {pipeline_mode = #tpu.pipeline_mode<synchronous>, transform_indices = @transform_3, window_bounds = array<i64: 1, 128>}, {pipeline_mode = #tpu.pipeline_mode<synchronous>, transform_indices = @transform_4, window_bounds = array<i64: 1, 1>}, {transform_indices = @transform_5, window_bounds = array<i64: 8, 1>}]} {
    %c0 = arith.constant 0 : index
    %c0_0 = arith.constant 0 : index
    %0 = vector.load %arg1[%c0, %c0_0] : memref<8x48xbf16, #tpu.memory_space<vmem>>, vector<8x48xbf16>
    %c0_1 = arith.constant 0 : index
    %c0_2 = arith.constant 0 : index
    %1 = vector.load %arg2[%c0_1, %c0_2] : memref<48x128xbf16, #tpu.memory_space<vmem>>, vector<48x128xbf16>
    %cst = arith.constant dense<0.000000e+00> : vector<8x128xf32>
    %2 = tpu.matmul %0, %1, %cst {dimension_numbers = #tpu.dot_dimension_numbers<[1], [0], [0], [1], [0, 0, 1, 1], [], []>} : vector<8x48xbf16>, vector<48x128xbf16>, vector<8x128xf32> -> vector<8x128xf32>
    %c0_3 = arith.constant 0 : index
    %c0_4 = arith.constant 0 : index
    %3 = vector.load %arg3[%c0_3, %c0_4] : memref<1x128xf32, #tpu.memory_space<vmem>>, vector<1x128xf32>
    %4 = vector.broadcast %3 : vector<1x128xf32> to vector<8x128xf32>
    %5 = arith.addf %2, %4 : vector<8x128xf32>
    %cst_5 = arith.constant 0.000000e+00 : f32
    %6 = vector.broadcast %cst_5 : f32 to vector<8x128xf32>
    %7 = arith.cmpf ogt, %5, %6 : vector<8x128xf32>
    %cst_6 = arith.constant 2.000000e-01 : f32
    %8 = vector.broadcast %cst_6 : f32 to vector<8x128xf32>
    %9 = arith.mulf %8, %5 : vector<8x128xf32>
    %10 = arith.select %7, %5, %9 : vector<8x128xi1>, vector<8x128xf32>
    %c0_7 = arith.constant 0 : index
    %c0_8 = arith.constant 0 : index
    %11 = vector.load %arg4[%c0_7, %c0_8] : memref<1x128xf32, #tpu.memory_space<vmem>>, vector<1x128xf32>
    %12 = vector.broadcast %11 : vector<1x128xf32> to vector<8x128xf32>
    %13 = arith.mulf %10, %12 : vector<8x128xf32>
    %cst_9 = arith.constant dense<0.000000e+00> : vector<8xf32>
    %14 = vector.multi_reduction <add>, %13, %cst_9 [1] : vector<8x128xf32> to vector<8xf32>
    %15 = vector.shape_cast %14 : vector<8xf32> to vector<8x1xf32>
    %c0_10 = arith.constant 0 : index
    %c0_11 = arith.constant 0 : index
    %16 = vector.load %arg5[%c0_10, %c0_11] : memref<1x1xf32, #tpu.memory_space<vmem>>, vector<1x1xf32>
    %17 = vector.broadcast %16 : vector<1x1xf32> to vector<8x1xf32>
    %18 = arith.addf %15, %17 : vector<8x1xf32>
    %c0_12 = arith.constant 0 : index
    %c0_13 = arith.constant 0 : index
    %19 = vector.load %arg6[%c0_12, %c0_13] : memref<8x1xf32, #tpu.memory_space<vmem>>, vector<8x1xf32>
    tpu.vector_store %arg6[%c0_12, %c0_13], %18 {strides = array<i32>} : memref<8x1xf32, #tpu.memory_space<vmem>>, vector<8x1xf32>,
    return
  }
  func.func @transform_0(%arg0: i32) -> (i32, i32) {
    %c0_i32 = arith.constant 0 : i32
    %c0_i32_0 = arith.constant 0 : i32
    return %arg0, %c0_i32 : i32, i32
  }
  func.func @transform_1(%arg0: i32) -> (i32, i32) {
    %c0_i32 = arith.constant 0 : i32
    %c0_i32_0 = arith.constant 0 : i32
    %c0_i32_1 = arith.constant 0 : i32
    return %c0_i32, %c0_i32_0 : i32, i32
  }
  func.func @transform_2(%arg0: i32) -> (i32, i32) {
    %c0_i32 = arith.constant 0 : i32
    %c0_i32_0 = arith.constant 0 : i32
    %c0_i32_1 = arith.constant 0 : i32
    return %c0_i32, %c0_i32_0 : i32, i32
  }
  func.func @transform_3(%arg0: i32) -> (i32, i32) {
    %c0_i32 = arith.constant 0 : i32
    %c0_i32_0 = arith.constant 0 : i32
    %c0_i32_1 = arith.constant 0 : i32
    return %c0_i32, %c0_i32_0 : i32, i32
  }
  func.func @transform_4(%arg0: i32) -> (i32, i32) {
    %c0_i32 = arith.constant 0 : i32
    %c0_i32_0 = arith.constant 0 : i32
    %c0_i32_1 = arith.constant 0 : i32
    return %c0_i32, %c0_i32_0 : i32, i32
  }
  func.func @transform_5(%arg0: i32) -> (i32, i32) {
    %c0_i32 = arith.constant 0 : i32
    %c0_i32_0 = arith.constant 0 : i32
    return %arg0, %c0_i32 : i32, i32
  }
}

</mosaic_0001>

<llo_original>
// kernel: tpu_custom_call.1
$region0: #{tpu_custom_call.1}
  #allocation0 [shape = 'u32[]', space=smem, size = 0x4, offset = 0x4, fixed_abs, tag = 'smem constant byte address 0x4 - core index']
  #allocation1 [shape = 'u32[72,128]{1,0:T(1,128)}', space=vmem, size = 0x9000, scoped, tag = 'internal scratch']
  #allocation2 [shape = 'f32[1,1]{1,0:T(1,128)S(1)}', space=vmem, size = 0x200, scoped, tag = 'scoped memory for tpu_custom_call.1']
  %s0 = inlined_call_operand.hbm [shape: bf16[8,48], index: 0, kind: input, shape index: {}]
  %s1 = inlined_call_operand.hbm [shape: bf16[48,128], index: 1, kind: input, shape index: {}]
  %s2 = inlined_call_operand.vmem [shape: f32[1,128], index: 2, kind: input, shape index: {}]
  %s3 = inlined_call_operand.vmem [shape: f32[1,128], index: 3, kind: input, shape index: {}]
  %s4 = inlined_call_operand.<no memory space> [shape: f32[1,1], index: 4, kind: input, shape index: {}]
  %s5 = inlined_call_operand.vmem [shape: f32[8,1], index: 5, kind: output, shape index: {}]
  %s6 = sld [smem:[#allocation0]]
  $region38: #{tpu_custom_call.1} parent=0
    _
  %s8 = ssub.s32 1, %s6
  %s9 = scalar_select 0, %s8, %s6
  %v10 = vstv %s4
  %11 = vst [vmem:[#allocation2] sm:$0x1] %v10
  $region1: #{tpu_custom_call.1} parent=0
    #allocation3 [shape = 'u8[2048]{0}', space=vmem, size = 0x800, scoped, tag = 'input window, operand 0, single buffered']
    #allocation4 [shape = 's32[1]{0}', space=sflag, size = 0x4, scoped, tag = 'scoped memory for tpu_custom_call.1']
    #allocation5 [shape = 'u8[12288]{0}', space=vmem, size = 0x3000, scoped, tag = 'input window, operand 1, single buffered']
    #allocation6 [shape = 's32[1]{0}', space=sflag, size = 0x4, scoped, tag = 'scoped memory for tpu_custom_call.1']
    %12 = vsyncpa [#allocation4], 0
    %13 = vsyncpa [#allocation6], 0
    // Predicated region
    $region2: #{tpu_custom_call.1} parent=1 // pred_check
      _
    $region3: #{tpu_custom_call.1} parent=1 // pred_check_branch
      %15 = sbr.rel (0) target = $region5
    $region4: #{tpu_custom_call.1} parent=1 // pred_region
      %17 = vsyncadd [#allocation4], 0
      %s19 = sshll.u32 %s0, 4
      %s20 = int_to_ptr.hbm [resolvable:$true] %s19
      %s21 = sshll.u32 [#allocation3], 4
      %s22 = int_to_ptr.vmem [resolvable:$true] %s21
      %24 = dma.hbm_to_vmem [thread:$0]  %s20, 64, %s22, [#allocation4]
    $region5: #{tpu_custom_call.1} parent=1 // pred_fallthru
      _
    // Predicated region
    $region6: #{tpu_custom_call.1} parent=1 // pred_check
      _
    $region7: #{tpu_custom_call.1} parent=1 // pred_check_branch
      %26 = sbr.rel (0) target = $region9
    $region8: #{tpu_custom_call.1} parent=1 // pred_region
      %28 = vsyncadd [#allocation6], 0
      %s29 = sshll.u32 %s1, 4
      %s30 = int_to_ptr.hbm [resolvable:$true] %s29
      %s31 = sshll.u32 [#allocation5], 4
      %s32 = int_to_ptr.vmem [resolvable:$true] %s31
      %37 = dma.hbm_to_vmem [thread:$0]  %s30, 384, %s32, [#allocation6], 64, 64, 4
    $region9: #{tpu_custom_call.1} parent=1 // pred_fallthru
      _
    // Predicated region
    $region10: #{tpu_custom_call.1} parent=1 // pred_check
      _
    $region11: #{tpu_custom_call.1} parent=1 // pred_check_branch
      %39 = sbr.rel (0) target = $region13
    $region12: #{tpu_custom_call.1} parent=1 // pred_region
      _
    $region13: #{tpu_custom_call.1} parent=1 // pred_fallthru
      _
    // Predicated region
    $region14: #{tpu_custom_call.1} parent=1 // pred_check
      _
    $region15: #{tpu_custom_call.1} parent=1 // pred_check_branch
      %41 = sbr.rel (0) target = $region17
    $region16: #{tpu_custom_call.1} parent=1 // pred_region
      _
    $region17: #{tpu_custom_call.1} parent=1 // pred_fallthru
      _
    // Predicated region
    $region18: #{tpu_custom_call.1} parent=1 // pred_check
      _
    $region19: #{tpu_custom_call.1} parent=1 // pred_check_branch
      %43 = sbr.rel (0) target = $region21
    $region20: #{tpu_custom_call.1} parent=1 // pred_region
      _
    $region21: #{tpu_custom_call.1} parent=1 // pred_fallthru
      _
    // Predicated region
    $region22: #{tpu_custom_call.1} parent=1 // pred_check
      _
    $region23: #{tpu_custom_call.1} parent=1 // pred_check_branch
      %45 = sbr.rel (0) target = $region25
    $region24: #{tpu_custom_call.1} parent=1 // pred_region
      %47 = dma.done [#allocation4], 64
    $region25: #{tpu_custom_call.1} parent=1 // pred_fallthru
      _
    // Predicated region
    $region26: #{tpu_custom_call.1} parent=1 // pred_check
      _
    $region27: #{tpu_custom_call.1} parent=1 // pred_check_branch
      %49 = sbr.rel (0) target = $region29
    $region28: #{tpu_custom_call.1} parent=1 // pred_region
      %51 = dma.done [#allocation6], 384
    $region29: #{tpu_custom_call.1} parent=1 // pred_fallthru
      _
    %v53 = vld [vmem:[#allocation3] sm:$0xf]
    %v54 = vld [vmem:[#allocation5] sm:$0xf]
    %v55 = vld [vmem:[#allocation5 + $0x4] sm:$0xf]
    %v56 = vld [vmem:[#allocation5 + $0x8] sm:$0xf]
    %v57 = vld [vmem:[#allocation5 + $0xc] sm:$0xf]
    %v58 = vld [vmem:[#allocation5 + $0x10] sm:$0xf]
    %v59 = vld [vmem:[#allocation5 + $0x14] sm:$0xf]
    %v60 = vld [vmem:[%s2] sm:$0x1]
    %v62 = vperm.slane %v60, 0
    %v70 = vunpack.c.l.b16 %v54
    %v71 = vunpack.c.l.b16 %v55
    %v72 = vunpack.c.l.b16 %v56
    %v73 = vunpack.c.l.b16 %v57
    %v74 = vunpack.c.l.b16 %v58
    %v75 = vunpack.c.l.b16 %v59
    %v76 = vpack.c.b16 %v71, %v70
    %v77 = vpack.c.b16 %v73, %v72
    %v78 = vpack.c.b16 %v75, %v74
    %vm82 = vcmask 392192
    %v84 = vsel %vm82, %v53, 0
    %86 = vmatpush.bf16.msra.mxu0 0
    %87 = vmatpush.bf16.msra.mxu0 0
    %88 = vmatpush.bf16.msra.mxu0 0
    %89 = vmatpush.bf16.msra.mxu0 0
    %90 = vmatpush.bf16.msra.mxu0 0
    %91 = vmatpush.bf16.msra.mxu0 %v78
    %92 = vmatpush.bf16.msra.mxu0 %v77
    %93 = vmatpush.bf16.msra.mxu0 %v76
    %94 = vmatmul.bf16.gmra.mxu0 %v84
    %v95 = vpop.f32.mrf.mxu0
    %v96 = vadd.f32 %v62, %v95
    %v97 = vpop.f32.mrf.mxu0
    %98 = vdwg.mxu0
    %vm99 = vcmp.gt.f32.partialorder %v96, 0.0
    %v100 = vmul.f32 %v96, 0.2
    %v101 = vsel %vm99, %v96, %v100
    %v102 = vld [vmem:[%s3] sm:$0x1]
    %v104 = vperm.slane %v102, 0
    %v106 = vmul.f32 %v101, %v104
    %107 = vadd.xlane.f32.xlu0 %v106
    %v108 = vpop.xlane.xlu0 %107
    %v109 = vld [vmem:[#allocation2] sm:$0x1]
    %v111 = vperm.slane %v109, 0
    %v113 = vadd.f32 %v108, %v111
    %vm114 = vcmask 7168
    %115 = vst.msk [vmem:[%s5] sm:$0xff] %vm114, %v113
    // Predicated region
    $region30: #{tpu_custom_call.1} parent=1 // pred_check
      _
    $region31: #{tpu_custom_call.1} parent=1 // pred_check_branch
      %117 = sbr.rel (0) target = $region33
    $region32: #{tpu_custom_call.1} parent=1 // pred_region
      _
    $region33: #{tpu_custom_call.1} parent=1 // pred_fallthru
      _
    // Predicated region
    $region34: #{tpu_custom_call.1} parent=1 // pred_check
      _
    $region35: #{tpu_custom_call.1} parent=1 // pred_check_branch
      %119 = sbr.rel (0) target = $region37
    $region36: #{tpu_custom_call.1} parent=1 // pred_region
      _
    $region37: #{tpu_custom_call.1} parent=1 // pred_fallthru
      _
    %120 = vsyncpa [#allocation4], 1
    %121 = vsyncpa [#allocation6], 1

</llo_original>
